<compile_context>
chip_gen: v5e
topology: v5e:2x2
jax: 0.10.0
libtpu: 0.0.40
codegen_flags: <defaults>
</compile_context>

<pallas_src>
import functools

import jax
import jax.numpy as jnp
from jax import lax
from jax.experimental import pallas as pl
from jax.experimental.pallas import tpu as pltpu

_MIB = 1024 * 1024


def _ceil_to(x, m):
    return -(-x // m) * m


def _bce_partial_kernel(inv_temp, tile_n,
                        nvt_ref,                       # scalar prefetch (SMEM): valid seq-tiles per batch tile
                        len_ref, oe_ref, se_ref, w_ref, r_ref,
                        num_ref, den_ref):
    bi = pl.program_id(0)
    ni = pl.program_id(1)
    tile_valid = ni < nvt_ref[bi]

    @pl.when(tile_valid)
    def _compute():
        x = oe_ref[...].astype(jnp.float32)            # (TB, TN, D)
        t = se_ref[...].astype(jnp.float32)            # (TB, TN, D)
        lens = len_ref[...]                            # (TB, 1) int32
        tb, tn = x.shape[0], x.shape[1]

        # Jagged validity mask: global position n < lengths[row].  Rows past B
        # carry length 0 (lengths is zero-padded) and positions past N always
        # satisfy n >= lens, so ragged edge blocks are masked as well.
        n_pos = ni * tile_n + lax.broadcasted_iota(jnp.int32, (tb, tn), 1)
        valid = n_pos < lens                           # (TB, TN)

        # Per-position dot-product interaction, scaled by 1/temperature.
        logits = jnp.sum(x * t, axis=-1) * inv_temp    # (TB, TN)
        # Mask BEFORE exp/log1p so garbage from un-DMA'd ragged regions cannot
        # produce NaN/Inf that survives multiplication by a zero weight.
        logits = jnp.where(valid, logits, 0.0)
        r = jnp.where(valid, r_ref[...].astype(jnp.float32), 0.0)
        w = jnp.where(valid, w_ref[...].astype(jnp.float32), 0.0)

        # Numerically stable binary_cross_entropy_with_logits (reduction='none'):
        #   max(x, 0) - x*y + log(1 + exp(-|x|))
        bce = (jnp.maximum(logits, 0.0) - logits * r
               + jnp.log1p(jnp.exp(-jnp.abs(logits))))

        # Reduce the block to per-row partials (XLU lane reduce rides a slot that
        # is idle in this HBM-bound kernel): only TB floats of writeback per step.
        num_ref[0, 0] = jnp.sum(bce * w, axis=1, keepdims=True)   # (TB, 1)
        den_ref[0, 0] = jnp.sum(w, axis=1, keepdims=True)         # (TB, 1)

    @pl.when(jnp.logical_not(tile_valid))
    def _skip():                                       # fully-padded tile: contributes zero
        num_ref[...] = jnp.zeros_like(num_ref)
        den_ref[...] = jnp.zeros_like(den_ref)


def bce_loss_with_ratings(lengths, output_embeddings, supervision_embeddings,
                          supervision_weights, supervision_ratings,
                          temperature=1.0):
    B, N, D = output_embeddings.shape
    inv_temp = 1.0 / float(temperature)

    emb_item = jnp.dtype(output_embeddings.dtype).itemsize
    w_item = jnp.dtype(supervision_weights.dtype).itemsize
    r_item = jnp.dtype(supervision_ratings.dtype).itemsize
    d_lanes = _ceil_to(D, 128)                         # trailing dim is lane-padded to 128 in VMEM

    TB = B if B <= 8 else 8

    def working_set_bytes(tb, tn):
        tn_sub = _ceil_to(tn, 8)
        tn_lane = _ceil_to(tn, 128)
        tb_sub = _ceil_to(tb, 8)
        emb_blk = tb * tn_sub * d_lanes                # elements in one emb block (VMEM layout, lane-padded)
        emb_in = 2 * 2 * emb_blk * emb_item            # 2 embedding inputs x 2 pipeline buffers
        emb_f32 = 3 * emb_blk * 4                      # in-kernel f32 casts + x*t intermediates
        wr_in = 2 * tb_sub * tn_lane * (w_item + r_item)   # weights/ratings, double-buffered
        small = 6 * tb_sub * tn_lane * 4               # logits / masks / bce temporaries
        misc = 6 * tb_sub * 128 * 4                    # lengths + tiny partial-sum outputs
        return emb_in + emb_f32 + wr_in + small + misc

    BUDGET = 36 * _MIB                                 # working-set target; headroom under the 48 MiB limit (v7x: 64 MiB physical)
    if working_set_bytes(TB, N) <= BUDGET:
        TN = N                                         # full-sequence block
    else:
        TN = None
        for cand in (2048, 1024, 512, 256, 128):       # multiples of 128 keep (8,128) tiling happy
            if cand <= N and working_set_bytes(TB, cand) <= BUDGET:
                TN = cand
                break
        if TN is None:                                 # pathological D: shrink the batch tile, floor at (1, min(N,128))
            TB, TN = 1, min(N, 128)
            # TODO(synk): tile D with an in-kernel accumulator if even (1, 128) blocks overflow VMEM.

    gb = -(-B // TB)
    gn = -(-N // TN)
    B_pad = gb * TB

    # lengths is the only padded input (B ints); the (B, N, D) / (B, N) streams are
    # consumed in place -- no jnp.pad copy of the dominant HBM traffic.
    len_p = lengths.astype(jnp.int32)
    if B_pad > B:
        len_p = jnp.pad(len_p, (0, B_pad - B))         # padded rows get length 0 -> fully masked
    # number of sequence tiles containing at least one valid position, per batch tile
    nvt = ((jnp.max(len_p.reshape(gb, TB), axis=1) + TN - 1) // TN).astype(jnp.int32)
    len2d = len_p[:, None]                             # (B_pad, 1) for the in-kernel mask

    kernel = functools.partial(_bce_partial_kernel, inv_temp, TN)

    def _clamp_ni(bi, ni, nvt_ref):                    # padded seq tiles reuse the previous block -> no new DMA
        return jnp.minimum(ni, jnp.maximum(nvt_ref[bi] - 1, 0))

    emb_map = lambda bi, ni, nvt_ref: (bi, _clamp_ni(bi, ni, nvt_ref), 0)
    wr_map = lambda bi, ni, nvt_ref: (bi, _clamp_ni(bi, ni, nvt_ref))
    len_map = lambda bi, ni, nvt_ref: (bi, 0)
    out_map = lambda bi, ni, nvt_ref: (bi, ni, 0, 0)

    # 48 MiB covers v5e's 16 MiB scoped default and leaves headroom on v7x's 64 MiB
    # physical VMEM; only the pathological-D fallback ever asks for more.
    vmem_limit = 48 * _MIB
    ws = working_set_bytes(TB, TN)
    if ws + 8 * _MIB > vmem_limit:
        vmem_limit = ws + 8 * _MIB

    num_part, den_part = pl.pallas_call(
        kernel,
        out_shape=(jax.ShapeDtypeStruct((gb, gn, TB, 1), jnp.float32),
                   jax.ShapeDtypeStruct((gb, gn, TB, 1), jnp.float32)),
        grid_spec=pltpu.PrefetchScalarGridSpec(
            num_scalar_prefetch=1,                     # nvt -> SMEM; used by index_maps and the skip gate
            grid=(gb, gn),
            in_specs=[
                pl.BlockSpec((TB, 1), len_map),        # lengths (validity mask)
                pl.BlockSpec((TB, TN, D), emb_map),    # output_embeddings (native dtype)
                pl.BlockSpec((TB, TN, D), emb_map),    # supervision_embeddings
                pl.BlockSpec((TB, TN), wr_map),        # supervision_weights
                pl.BlockSpec((TB, TN), wr_map),        # supervision_ratings
            ],
            out_specs=[pl.BlockSpec((1, 1, TB, 1), out_map),
                       pl.BlockSpec((1, 1, TB, 1), out_map)],
        ),
        compiler_params=pltpu.CompilerParams(
            dimension_semantics=("parallel", "parallel"),
            vmem_limit_bytes=int(vmem_limit)),
    )(nvt, len2d, output_embeddings, supervision_embeddings,
      supervision_weights, supervision_ratings)

    # Tiny (gb * gn * TB)-element reduction + divide; negligible next to the embedding reads.
    return jnp.sum(num_part) / jnp.sum(den_part)


def _reference(lengths, out_emb, sup_emb, weights, ratings, temperature):
    """Pure-JAX reference of the dense->jagged + BCE-with-logits loss."""
    _, N, _ = out_emb.shape
    logits = jnp.einsum('bnd,bnd->bn', out_emb.astype(jnp.float32),
                        sup_emb.astype(jnp.float32)) / temperature
    r = ratings.astype(jnp.float32)
    bce = (jnp.maximum(logits, 0.0) - logits * r
           + jnp.log1p(jnp.exp(-jnp.abs(logits))))
    mask = (jnp.arange(N)[None, :] < lengths[:, None]).astype(jnp.float32)
    wm = weights.astype(jnp.float32) * mask
    return jnp.sum(bce * wm) / jnp.sum(wm)


if __name__ == "__main__":
    temperature = 0.7

    def run_case(key, B, N, D, lengths):
        k1, k2, k3, k4 = jax.random.split(key, 4)
        oe = jax.random.normal(k1, (B, N, D), dtype=jnp.float32)
        se = jax.random.normal(k2, (B, N, D), dtype=jnp.float32)
        w = jax.random.uniform(k3, (B, N), dtype=jnp.float32) + 0.1
        r = (jax.random.uniform(k4, (B, N)) > 0.5).astype(jnp.float32)
        # supervision_ids are unused by the dot-product interaction -> not passed to the kernel.
        loss = jax.block_until_ready(
            bce_loss_with_ratings(lengths, oe, se, w, r, temperature))
        ref = _reference(lengths, oe, se, w, r, temperature)
        assert jnp.allclose(loss, ref, rtol=1e-5, atol=1e-5), (loss, ref)

    key = jax.random.PRNGKey(0)
    k0, k1 = jax.random.split(key)

    # Small shape matching the module's forward (B, N, D) + jagged lengths.
    run_case(k0, 2, 8, 32, jnp.array([5, 8], dtype=jnp.int32))
    # Multi-batch-tile grid with a ragged batch edge (B=11, TB=8) and a zero-length row:
    # exercises the unpadded ragged-block masking, the nvt gate and clamped index_maps.
    run_case(k1, 11, 8, 32,
             jnp.array([3, 8, 0, 5, 7, 2, 8, 1, 4, 6, 8], dtype=jnp.int32))

    print("KERNEL_OK")
</pallas_src>

<mosaic_0001>
module attributes {stable_mosaic.version = 11 : i64} {
  func.func @_bce_partial_kernel(%arg0: i32, %arg1: i32, %arg2: memref<1xi32, #tpu.memory_space<smem>>, %arg3: memref<2x1xi32, #tpu.memory_space<vmem>>, %arg4: memref<2x8x32xf32, #tpu.memory_space<vmem>>, %arg5: memref<2x8x32xf32, #tpu.memory_space<vmem>>, %arg6: memref<2x8xf32, #tpu.memory_space<vmem>>, %arg7: memref<2x8xf32, #tpu.memory_space<vmem>>, %arg8: memref<1x1x2x1xf32, #tpu.memory_space<vmem>>, %arg9: memref<1x1x2x1xf32, #tpu.memory_space<vmem>>) attributes {dimension_semantics = [#tpu.dimension_semantics<parallel>, #tpu.dimension_semantics<parallel>], iteration_bounds = array<i64: 1, 1>, scalar_prefetch = 1 : i64, scratch_operands = 0 : i64, tpu.core_type = #tpu.core_type<tc>, window_params = [{transform_indices = @transform_0, window_bounds = array<i64: 2, 1>}, {transform_indices = @transform_1, window_bounds = array<i64: 2, 8, 32>}, {transform_indices = @transform_2, window_bounds = array<i64: 2, 8, 32>}, {transform_indices = @transform_3, window_bounds = array<i64: 2, 8>}, {transform_indices = @transform_4, window_bounds = array<i64: 2, 8>}, {transform_indices = @transform_5, window_bounds = array<i64: 1, 1, 2, 1>}, {transform_indices = @transform_6, window_bounds = array<i64: 1, 1, 2, 1>}]} {
    %0 = arith.index_cast %arg0 : i32 to index
    %1 = memref.load %arg2[%0] : memref<1xi32, #tpu.memory_space<smem>>
    %2 = arith.cmpi slt, %arg1, %1 : i32
    %3 = arith.extui %2 : i1 to i32
    %c0_i32 = arith.constant 0 : i32
    %4 = arith.cmpi ne, %3, %c0_i32 : i32
    scf.if %4 {
      %c0 = arith.constant 0 : index
      %c0_1 = arith.constant 0 : index
      %c0_2 = arith.constant 0 : index
      %8 = vector.load %arg4[%c0, %c0_1, %c0_2] : memref<2x8x32xf32, #tpu.memory_space<vmem>>, vector<2x8x32xf32>
      %c0_3 = arith.constant 0 : index
      %c0_4 = arith.constant 0 : index
      %c0_5 = arith.constant 0 : index
      %9 = vector.load %arg5[%c0_3, %c0_4, %c0_5] : memref<2x8x32xf32, #tpu.memory_space<vmem>>, vector<2x8x32xf32>
      %c0_6 = arith.constant 0 : index
      %c0_7 = arith.constant 0 : index
      %10 = vector.load %arg3[%c0_6, %c0_7] : memref<2x1xi32, #tpu.memory_space<vmem>>, vector<2x1xi32>
      %c8_i32 = arith.constant 8 : i32
      %11 = arith.muli %arg1, %c8_i32 : i32
      %12 = tpu.iota {dimensions = array<i32: 1>} : vector<2x8xi32>
      %13 = vector.broadcast %11 : i32 to vector<2x8xi32>
      %14 = arith.addi %13, %12 : vector<2x8xi32>
      %15 = vector.broadcast %10 : vector<2x1xi32> to vector<2x8xi32>
      %16 = arith.cmpi slt, %14, %15 : vector<2x8xi32>
      %17 = arith.mulf %8, %9 : vector<2x8x32xf32>
      %cst = arith.constant dense<0.000000e+00> : vector<2x8xf32>
      %18 = vector.multi_reduction <add>, %17, %cst [2] : vector<2x8x32xf32> to vector<2x8xf32>
      %cst_8 = arith.constant 1.42857146 : f32
      %19 = vector.broadcast %cst_8 : f32 to vector<2x8xf32>
      %20 = arith.mulf %18, %19 : vector<2x8xf32>
      %cst_9 = arith.constant 0.000000e+00 : f32
      %21 = vector.broadcast %cst_9 : f32 to vector<2x8xf32>
      %22 = arith.select %16, %20, %21 : vector<2x8xi1>, vector<2x8xf32>
      %c0_10 = arith.constant 0 : index
      %c0_11 = arith.constant 0 : index
      %23 = vector.load %arg7[%c0_10, %c0_11] : memref<2x8xf32, #tpu.memory_space<vmem>>, vector<2x8xf32>
      %cst_12 = arith.constant 0.000000e+00 : f32
      %24 = vector.broadcast %cst_12 : f32 to vector<2x8xf32>
      %25 = arith.select %16, %23, %24 : vector<2x8xi1>, vector<2x8xf32>
      %c0_13 = arith.constant 0 : index
      %c0_14 = arith.constant 0 : index
      %26 = vector.load %arg6[%c0_13, %c0_14] : memref<2x8xf32, #tpu.memory_space<vmem>>, vector<2x8xf32>
      %cst_15 = arith.constant 0.000000e+00 : f32
      %27 = vector.broadcast %cst_15 : f32 to vector<2x8xf32>
      %28 = arith.select %16, %26, %27 : vector<2x8xi1>, vector<2x8xf32>
      %cst_16 = arith.constant 0.000000e+00 : f32
      %29 = vector.broadcast %cst_16 : f32 to vector<2x8xf32>
      %30 = arith.maximumf %22, %29 : vector<2x8xf32>
      %31 = arith.mulf %22, %25 : vector<2x8xf32>
      %32 = arith.subf %30, %31 : vector<2x8xf32>
      %33 = math.absf %22 : vector<2x8xf32>
      %cst_17 = arith.constant 0.000000e+00 : f32
      %34 = vector.broadcast %cst_17 : f32 to vector<2x8xf32>
      %35 = arith.subf %34, %33 : vector<2x8xf32>
      %36 = math.exp %35 : vector<2x8xf32>
      %37 = math.log1p %36 : vector<2x8xf32>
      %38 = arith.addf %32, %37 : vector<2x8xf32>
      %39 = arith.mulf %38, %28 : vector<2x8xf32>
      %cst_18 = arith.constant dense<0.000000e+00> : vector<2xf32>
      %40 = vector.multi_reduction <add>, %39, %cst_18 [1] : vector<2x8xf32> to vector<2xf32>
      %41 = vector.shape_cast %40 : vector<2xf32> to vector<2x1xf32>
      %c0_19 = arith.constant 0 : index
      %c0_20 = arith.constant 0 : index
      %c0_21 = arith.constant 0 : index
      %c0_22 = arith.constant 0 : index
      %42 = vector.load %arg8[%c0_19, %c0_20, %c0_21, %c0_22] : memref<1x1x2x1xf32, #tpu.memory_space<vmem>>, vector<1x1x2x1xf32>
      %43 = vector.shape_cast %42 : vector<1x1x2x1xf32> to vector<2x1xf32>
      %44 = vector.shape_cast %41 : vector<2x1xf32> to vector<1x1x2x1xf32>
      tpu.vector_store %arg8[%c0_19, %c0_20, %c0_21, %c0_22], %44 {strides = array<i32>} : memref<1x1x2x1xf32, #tpu.memory_space<vmem>>, vector<1x1x2x1xf32>,
      %cst_23 = arith.constant dense<0.000000e+00> : vector<2xf32>
      %45 = vector.multi_reduction <add>, %28, %cst_23 [1] : vector<2x8xf32> to vector<2xf32>
      %46 = vector.shape_cast %45 : vector<2xf32> to vector<2x1xf32>
      %c0_24 = arith.constant 0 : index
      %c0_25 = arith.constant 0 : index
      %c0_26 = arith.constant 0 : index
      %c0_27 = arith.constant 0 : index
      %47 = vector.load %arg9[%c0_24, %c0_25, %c0_26, %c0_27] : memref<1x1x2x1xf32, #tpu.memory_space<vmem>>, vector<1x1x2x1xf32>
      %48 = vector.shape_cast %47 : vector<1x1x2x1xf32> to vector<2x1xf32>
      %49 = vector.shape_cast %46 : vector<2x1xf32> to vector<1x1x2x1xf32>
      tpu.vector_store %arg9[%c0_24, %c0_25, %c0_26, %c0_27], %49 {strides = array<i32>} : memref<1x1x2x1xf32, #tpu.memory_space<vmem>>, vector<1x1x2x1xf32>,
    } else {
    }
    %true = arith.constant true
    %5 = arith.xori %2, %true : i1
    %6 = arith.extui %5 : i1 to i32
    %c0_i32_0 = arith.constant 0 : i32
    %7 = arith.cmpi ne, %6, %c0_i32_0 : i32
    scf.if %7 {
      %cst = arith.constant 0.000000e+00 : f32
      %8 = vector.broadcast %cst : f32 to vector<1x1x2x1xf32>
      %c0 = arith.constant 0 : index
      %c0_1 = arith.constant 0 : index
      %c0_2 = arith.constant 0 : index
      %c0_3 = arith.constant 0 : index
      %9 = vector.load %arg8[%c0, %c0_1, %c0_2, %c0_3] : memref<1x1x2x1xf32, #tpu.memory_space<vmem>>, vector<1x1x2x1xf32>
      tpu.vector_store %arg8[%c0, %c0_1, %c0_2, %c0_3], %8 {strides = array<i32>} : memref<1x1x2x1xf32, #tpu.memory_space<vmem>>, vector<1x1x2x1xf32>,
      %cst_4 = arith.constant 0.000000e+00 : f32
      %10 = vector.broadcast %cst_4 : f32 to vector<1x1x2x1xf32>
      %c0_5 = arith.constant 0 : index
      %c0_6 = arith.constant 0 : index
      %c0_7 = arith.constant 0 : index
      %c0_8 = arith.constant 0 : index
      %11 = vector.load %arg9[%c0_5, %c0_6, %c0_7, %c0_8] : memref<1x1x2x1xf32, #tpu.memory_space<vmem>>, vector<1x1x2x1xf32>
      tpu.vector_store %arg9[%c0_5, %c0_6, %c0_7, %c0_8], %10 {strides = array<i32>} : memref<1x1x2x1xf32, #tpu.memory_space<vmem>>, vector<1x1x2x1xf32>,
    } else {
    }
    return
  }
  func.func @transform_0(%arg0: i32, %arg1: i32, %arg2: memref<1xi32, #tpu.memory_space<smem>>) -> (i32, i32) {
    %c0_i32 = arith.constant 0 : i32
    %c0_i32_0 = arith.constant 0 : i32
    return %arg0, %c0_i32 : i32, i32
  }
  func.func @transform_1(%arg0: i32, %arg1: i32, %arg2: memref<1xi32, #tpu.memory_space<smem>>) -> (i32, i32, i32) {
    %0 = arith.index_cast %arg0 : i32 to index
    %1 = memref.load %arg2[%0] : memref<1xi32, #tpu.memory_space<smem>>
    %c1_i32 = arith.constant 1 : i32
    %2 = arith.subi %1, %c1_i32 : i32
    %c0_i32 = arith.constant 0 : i32
    %3 = arith.maxsi %2, %c0_i32 : i32
    %4 = arith.minsi %arg1, %3 : i32
    %c0_i32_0 = arith.constant 0 : i32
    %c0_i32_1 = arith.constant 0 : i32
    return %arg0, %4, %c0_i32_0 : i32, i32, i32
  }
  func.func @transform_2(%arg0: i32, %arg1: i32, %arg2: memref<1xi32, #tpu.memory_space<smem>>) -> (i32, i32, i32) {
    %0 = arith.index_cast %arg0 : i32 to index
    %1 = memref.load %arg2[%0] : memref<1xi32, #tpu.memory_space<smem>>
    %c1_i32 = arith.constant 1 : i32
    %2 = arith.subi %1, %c1_i32 : i32
    %c0_i32 = arith.constant 0 : i32
    %3 = arith.maxsi %2, %c0_i32 : i32
    %4 = arith.minsi %arg1, %3 : i32
    %c0_i32_0 = arith.constant 0 : i32
    %c0_i32_1 = arith.constant 0 : i32
    return %arg0, %4, %c0_i32_0 : i32, i32, i32
  }
  func.func @transform_3(%arg0: i32, %arg1: i32, %arg2: memref<1xi32, #tpu.memory_space<smem>>) -> (i32, i32) {
    %0 = arith.index_cast %arg0 : i32 to index
    %1 = memref.load %arg2[%0] : memref<1xi32, #tpu.memory_space<smem>>
    %c1_i32 = arith.constant 1 : i32
    %2 = arith.subi %1, %c1_i32 : i32
    %c0_i32 = arith.constant 0 : i32
    %3 = arith.maxsi %2, %c0_i32 : i32
    %4 = arith.minsi %arg1, %3 : i32
    %c0_i32_0 = arith.constant 0 : i32
    return %arg0, %4 : i32, i32
  }
  func.func @transform_4(%arg0: i32, %arg1: i32, %arg2: memref<1xi32, #tpu.memory_space<smem>>) -> (i32, i32) {
    %0 = arith.index_cast %arg0 : i32 to index
    %1 = memref.load %arg2[%0] : memref<1xi32, #tpu.memory_space<smem>>
    %c1_i32 = arith.constant 1 : i32
    %2 = arith.subi %1, %c1_i32 : i32
    %c0_i32 = arith.constant 0 : i32
    %3 = arith.maxsi %2, %c0_i32 : i32
    %4 = arith.minsi %arg1, %3 : i32
    %c0_i32_0 = arith.constant 0 : i32
    return %arg0, %4 : i32, i32
  }
  func.func @transform_5(%arg0: i32, %arg1: i32, %arg2: memref<1xi32, #tpu.memory_space<smem>>) -> (i32, i32, i32, i32) {
    %c0_i32 = arith.constant 0 : i32
    %c0_i32_0 = arith.constant 0 : i32
    %c0_i32_1 = arith.constant 0 : i32
    return %arg0, %arg1, %c0_i32, %c0_i32_0 : i32, i32, i32, i32
  }
  func.func @transform_6(%arg0: i32, %arg1: i32, %arg2: memref<1xi32, #tpu.memory_space<smem>>) -> (i32, i32, i32, i32) {
    %c0_i32 = arith.constant 0 : i32
    %c0_i32_0 = arith.constant 0 : i32
    %c0_i32_1 = arith.constant 0 : i32
    return %arg0, %arg1, %c0_i32, %c0_i32_0 : i32, i32, i32, i32
  }
}

</mosaic_0001>

<llo_original>
// kernel: tpu_custom_call.1
$region0: #{tpu_custom_call.1}
  #allocation0 [shape = 'u32[]', space=smem, size = 0x4, offset = 0x4, fixed_abs, tag = 'smem constant byte address 0x4 - core index']
  #allocation1 [shape = 'u32[72,128]{1,0:T(1,128)}', space=vmem, size = 0x9000, scoped, tag = 'internal scratch']
  #allocation2 [shape = 's32[1]{0}', space=sflag, size = 0x4, scoped, tag = 'scoped memory for tpu_custom_call.1']
  #allocation3 [shape = 's32[1]{0:T(128)S(6)}', space=smem, size = 0x200, scoped, tag = 'prefetched SMEM operand 0']
  %s0 = inlined_call_operand.<no memory space> [shape: s32[1], index: 0, kind: input, shape index: {}]
  %s1 = inlined_call_operand.vmem [shape: s32[2,1], index: 1, kind: input, shape index: {}]
  %s2 = inlined_call_operand.hbm [shape: f32[2,8,32], index: 2, kind: input, shape index: {}]
  %s3 = inlined_call_operand.hbm [shape: f32[2,8,32], index: 3, kind: input, shape index: {}]
  %s4 = inlined_call_operand.vmem [shape: f32[2,8], index: 4, kind: input, shape index: {}]
  %s5 = inlined_call_operand.vmem [shape: f32[2,8], index: 5, kind: input, shape index: {}]
  %s6 = inlined_call_operand.vmem [shape: f32[1,1,2,1], index: 6, kind: output, shape index: {0}]
  %s7 = inlined_call_operand.vmem [shape: f32[1,1,2,1], index: 7, kind: output, shape index: {1}]
  %8 = xla_tuple %s6, %s7
  %s9 = sld [smem:[#allocation0]]
  $region54: #{tpu_custom_call.1} parent=0
    _
  %s11 = ssub.s32 1, %s9
  %s12 = scalar_select 0, %s11, %s9
  %13 = sst [smem:[#allocation3]] %s0
  $region1: #{tpu_custom_call.1} parent=0
    #allocation4 [shape = 'u8[8192]{0}', space=vmem, size = 0x2000, scoped, tag = 'input window, operand 2, single buffered']
    #allocation5 [shape = 's32[1]{0}', space=sflag, size = 0x4, scoped, tag = 'scoped memory for tpu_custom_call.1']
    #allocation6 [shape = 'u8[8192]{0}', space=vmem, size = 0x2000, scoped, tag = 'input window, operand 3, single buffered']
    #allocation7 [shape = 's32[1]{0}', space=sflag, size = 0x4, scoped, tag = 'scoped memory for tpu_custom_call.1']
    %14 = vsyncpa [#allocation5], 0
    %15 = vsyncpa [#allocation7], 0
    // Predicated region
    $region2: #{tpu_custom_call.1} parent=1 // pred_check
      _
    $region3: #{tpu_custom_call.1} parent=1 // pred_check_branch
      %17 = sbr.rel (0) target = $region5
    $region4: #{tpu_custom_call.1} parent=1 // pred_region
      _
    $region5: #{tpu_custom_call.1} parent=1 // pred_fallthru
      _
    // Predicated region
    $region6: #{tpu_custom_call.1} parent=1 // pred_check
      _
    $region7: #{tpu_custom_call.1} parent=1 // pred_check_branch
      %19 = sbr.rel (0) target = $region9
    $region8: #{tpu_custom_call.1} parent=1 // pred_region
      %s20 = sld [smem:[#allocation3]]
      %s21 = ssub.s32 %s20, 1
      %p22 = scmp.gt.s32.totalorder %s21, 0
      %s23 = scalar_select %p22, %s21, 0
      %p24 = scmp.lt.s32.totalorder 0, %s23
      %s25 = scalar_select %p24, 0, %s23
      %27 = vsyncadd [#allocation5], 0
      %s28 = smul.addr %s25, 8
      %s29 = scalar_lea.hbm %s2, %s28
      %s30 = sshll.u32 %s29, 4
      %s31 = int_to_ptr.hbm [resolvable:$true] %s30
      %s32 = sshll.u32 [#allocation4], 4
      %s33 = int_to_ptr.vmem [resolvable:$true] %s32
      %38 = dma.hbm_to_vmem [thread:$0]  %s31, 256, %s33, [#allocation5], 128, 128, 8
    $region9: #{tpu_custom_call.1} parent=1 // pred_fallthru
      _
    // Predicated region
    $region10: #{tpu_custom_call.1} parent=1 // pred_check
      _
    $region11: #{tpu_custom_call.1} parent=1 // pred_check_branch
      %40 = sbr.rel (0) target = $region13
    $region12: #{tpu_custom_call.1} parent=1 // pred_region
      %s41 = sld [smem:[#allocation3]]
      %s42 = ssub.s32 %s41, 1
      %p43 = scmp.gt.s32.totalorder %s42, 0
      %s44 = scalar_select %p43, %s42, 0
      %p45 = scmp.lt.s32.totalorder 0, %s44
      %s46 = scalar_select %p45, 0, %s44
      %48 = vsyncadd [#allocation7], 0
      %s49 = smul.addr %s46, 8
      %s50 = scalar_lea.hbm %s3, %s49
      %s51 = sshll.u32 %s50, 4
      %s52 = int_to_ptr.hbm [resolvable:$true] %s51
      %s53 = sshll.u32 [#allocation6], 4
      %s54 = int_to_ptr.vmem [resolvable:$true] %s53
      %59 = dma.hbm_to_vmem [thread:$0]  %s52, 256, %s54, [#allocation7], 128, 128, 8
    $region13: #{tpu_custom_call.1} parent=1 // pred_fallthru
      _
    // Predicated region
    $region14: #{tpu_custom_call.1} parent=1 // pred_check
      _
    $region15: #{tpu_custom_call.1} parent=1 // pred_check_branch
      %61 = sbr.rel (0) target = $region17
    $region16: #{tpu_custom_call.1} parent=1 // pred_region
      %s62 = sld [smem:[#allocation3]]
      %s63 = ssub.s32 %s62, 1
      %p64 = scmp.gt.s32.totalorder %s63, 0
      %s65 = scalar_select %p64, %s63, 0
      %p66 = scmp.lt.s32.totalorder 0, %s65
      %s67 = scalar_select %p66, 0, %s65
      %p68 = scmp.lt.s32.totalorder %s67, 0
      %s69 = scalar_select %p68, %s67, 0
      %s70 = smul.addr %s69, 2
      %s71 = scalar_lea.vmem %s4, %s70
      %s72 = sld [smem:[#allocation3]]
      %s73 = ssub.s32 %s72, 1
      %p74 = scmp.gt.s32.totalorder %s73, 0
      %s75 = scalar_select %p74, %s73, 0
      %p76 = scmp.lt.s32.totalorder 0, %s75
      %s77 = scalar_select %p76, 0, %s75
    $region17: #{tpu_custom_call.1} parent=1 // pred_fallthru
      _
    // Predicated region
    $region18: #{tpu_custom_call.1} parent=1 // pred_check
      _
    $region19: #{tpu_custom_call.1} parent=1 // pred_check_branch
      %79 = sbr.rel (0) target = $region21
    $region20: #{tpu_custom_call.1} parent=1 // pred_region
      %s80 = sld [smem:[#allocation3]]
      %s81 = ssub.s32 %s80, 1
      %p82 = scmp.gt.s32.totalorder %s81, 0
      %s83 = scalar_select %p82, %s81, 0
      %p84 = scmp.lt.s32.totalorder 0, %s83
      %s85 = scalar_select %p84, 0, %s83
      %p86 = scmp.lt.s32.totalorder %s85, 0
      %s87 = scalar_select %p86, %s85, 0
      %s88 = smul.addr %s87, 2
      %s89 = scalar_lea.vmem %s5, %s88
      %s90 = sld [smem:[#allocation3]]
      %s91 = ssub.s32 %s90, 1
      %p92 = scmp.gt.s32.totalorder %s91, 0
      %s93 = scalar_select %p92, %s91, 0
      %p94 = scmp.lt.s32.totalorder 0, %s93
      %s95 = scalar_select %p94, 0, %s93
    $region21: #{tpu_custom_call.1} parent=1 // pred_fallthru
      _
    // Predicated region
    $region22: #{tpu_custom_call.1} parent=1 // pred_check
      _
    $region23: #{tpu_custom_call.1} parent=1 // pred_check_branch
      %97 = sbr.rel (0) target = $region25
    $region24: #{tpu_custom_call.1} parent=1 // pred_region
      %99 = dma.done [#allocation5], 256
    $region25: #{tpu_custom_call.1} parent=1 // pred_fallthru
      _
    // Predicated region
    $region26: #{tpu_custom_call.1} parent=1 // pred_check
      _
    $region27: #{tpu_custom_call.1} parent=1 // pred_check_branch
      %101 = sbr.rel (0) target = $region29
    $region28: #{tpu_custom_call.1} parent=1 // pred_region
      %103 = dma.done [#allocation7], 256
    $region29: #{tpu_custom_call.1} parent=1 // pred_fallthru
      _
    %s104 = sld [smem:[#allocation3]]
    %s105 = ssub.s32 %s104, 1
    %p106 = scmp.gt.s32.totalorder %s105, 0
    %s107 = scalar_select %p106, %s105, 0
    %p108 = scmp.lt.s32.totalorder 0, %s107
    %s109 = scalar_select %p108, 0, %s107
    %p110 = scmp.lt.s32.totalorder %s109, 0
    %s111 = scalar_select %p110, %s109, 0
    %s112 = smul.addr %s111, 2
    %s113 = scalar_lea.vmem %s4, %s112
    %s114 = sld [smem:[#allocation3]]
    %s115 = ssub.s32 %s114, 1
    %p116 = scmp.gt.s32.totalorder %s115, 0
    %s117 = scalar_select %p116, %s115, 0
    %p118 = scmp.lt.s32.totalorder 0, %s117
    %s119 = scalar_select %p118, 0, %s117
    %p120 = scmp.lt.s32.totalorder %s119, 0
    %s121 = scalar_select %p120, %s119, 0
    %s122 = smul.addr %s121, 2
    %s123 = scalar_lea.vmem %s5, %s122
    %s124 = sld [smem:[#allocation3]]
    %s125 = ssub.s32 %s124, 1
    %p126 = scmp.gt.s32.totalorder %s125, 0
    %s127 = scalar_select %p126, %s125, 0
    %p128 = scmp.lt.s32.totalorder 0, %s127
    %s129 = scalar_select %p128, 0, %s127
    %s130 = sld [smem:[#allocation3]]
    %s131 = ssub.s32 %s130, 1
    %p132 = scmp.gt.s32.totalorder %s131, 0
    %s133 = scalar_select %p132, %s131, 0
    %p134 = scmp.lt.s32.totalorder 0, %s133
    %s135 = scalar_select %p134, 0, %s133
    %s136 = sld [smem:[#allocation3]]
    %s137 = ssub.s32 %s136, 1
    %p138 = scmp.gt.s32.totalorder %s137, 0
    %s139 = scalar_select %p138, %s137, 0
    %p140 = scmp.lt.s32.totalorder 0, %s139
    %s141 = scalar_select %p140, 0, %s139
    %p142 = scmp.lt.s32.totalorder %s141, 0
    %s143 = scalar_select %p142, %s141, 0
    %s144 = smul.addr %s143, 2
    %s145 = scalar_lea.vmem %s4, %s144
    %s146 = sld [smem:[#allocation3]]
    %s147 = ssub.s32 %s146, 1
    %p148 = scmp.gt.s32.totalorder %s147, 0
    %s149 = scalar_select %p148, %s147, 0
    %p150 = scmp.lt.s32.totalorder 0, %s149
    %s151 = scalar_select %p150, 0, %s149
    %s152 = sld [smem:[#allocation3]]
    %s153 = ssub.s32 %s152, 1
    %p154 = scmp.gt.s32.totalorder %s153, 0
    %s155 = scalar_select %p154, %s153, 0
    %p156 = scmp.lt.s32.totalorder 0, %s155
    %s157 = scalar_select %p156, 0, %s155
    %p158 = scmp.lt.s32.totalorder %s157, 0
    %s159 = scalar_select %p158, %s157, 0
    %s160 = smul.addr %s159, 2
    %s161 = scalar_lea.vmem %s5, %s160
    %s162 = sld [smem:[#allocation3]]
    %s163 = ssub.s32 %s162, 1
    %p164 = scmp.gt.s32.totalorder %s163, 0
    %s165 = scalar_select %p164, %s163, 0
    %p166 = scmp.lt.s32.totalorder 0, %s165
    %s167 = scalar_select %p166, 0, %s165
    %s168 = sld [smem:[#allocation3]]
    %p169 = scmp.lt.s32.totalorder 0, %s168
    // Predicated region
    $region30: #{tpu_custom_call.1} parent=1 // pred_check
      %p170 = pneg %p169
    $region31: #{tpu_custom_call.1} parent=1 // pred_check_branch
      %172 = sbr.rel (%p170) target = $region33
    $region32: #{tpu_custom_call.1} parent=1 // pred_region
      %v173 = vld [vmem:[#allocation4] sm:$0xff]
      %v174 = vld [vmem:[#allocation4 + $0x8] sm:$0xff]
      %v175 = vld [vmem:[#allocation6] sm:$0xff]
      %v176 = vld [vmem:[#allocation6 + $0x8] sm:$0xff]
      %v177 = vld [vmem:[%s1] sm:$0x3]
      %s178 = smul.u32 0, 8
      %v179 = vlaneseq
      %v180 = vand.u32 %v179, 127
      %v181 = vstv %s178
      %v182 = vadd.s32 %v181, %v180
      %183 = vset.pattern.permute.xlu0 0
      %184 = vperm.xlu0 %183, %v177
      %v185 = vpop.permute.xlu0 %184
      %vm186 = vcmp.lt.s32.totalorder %v182, %v185
      %v187 = vmul.f32 %v173, %v175
      %v188 = vmul.f32 %v174, %v176
      %vm189 = vcmask 261120
      %v190 = vsel %vm189, %v187, 0.0
      %191 = vadd.xlane.f32.xlu0 %v190
      %v192 = vpop.xlane.xlu0 %191
      %v193 = vsel %vm189, %v188, 0.0
      %194 = vadd.xlane.f32.xlu0 %v193
      %v195 = vpop.xlane.xlu0 %194
      %v196 = vmul.f32 %v192, 1.4285715
      %v197 = vmul.f32 %v195, 1.4285715
      %v200 = vperm.slane %v196, %v180
      %v201 = vperm.slane %v197, %v180
      %vm202 = vcmask 1041409
      %v203 = vsel %vm202, %v201, %v200
      %v205 = vsel %vm186, %v203, 0.0
      %v206 = vld [vmem:[%s161] sm:$0x3]
      %v207 = vsel %vm186, %v206, 0.0
      %v208 = vld [vmem:[%s145] sm:$0x3]
      %v209 = vsel %vm186, %v208, 0.0
      %v210 = vmax.f32 %v205, 0.0
      %v211 = vmul.f32 %v205, %v207
      %v212 = vsub.f32 %v210, %v211
      %v213 = vand.u32 2147483647, %v205
      %v214 = vsub.f32 0.0, %v213
      %v215 = vmul.f32 %v214, 1.442695
      %v216 = vpow.pop %v215
      %v217 = vadd.f32 %v216, 1.0
      %v218 = vlog2.pop %v217
      %v219 = vmul.f32 %v218, 0.6931472
      %v220 = vmul.f32 -0.5, %v216
      %v221 = vadd.f32 %v220, 1.0
      %v222 = vmul.f32 %v221, %v216
      %v223 = vand.u32 2147483647, %v216
      %vm224 = vcmp.lt.f32.partialorder %v223, 0.0004427343
      %v225 = vsel %vm224, %v222, %v219
      %v226 = vadd.f32 %v212, %v225
      %v227 = vmul.f32 %v226, %v209
      %vm228 = vcmask 58368
      %v229 = vsel %vm228, %v227, 0.0
      %230 = vadd.xlane.f32.xlu0 %v229
      %v231 = vpop.xlane.xlu0 %230
      %vm232 = vcmask 1024
      %233 = vst.msk [vmem:[%s6] sm:$0x3] %vm232, %v231
      %v234 = vsel %vm228, %v209, 0.0
      %235 = vadd.xlane.f32.xlu0 %v234
      %v236 = vpop.xlane.xlu0 %235
      %237 = vst.msk [vmem:[%s7] sm:$0x3] %vm232, %v236
    $region33: #{tpu_custom_call.1} parent=1 // pred_fallthru
      _
    %p238 = scmp.ge.s32.totalorder 0, %s168
    // Predicated region
    $region34: #{tpu_custom_call.1} parent=1 // pred_check
      %p239 = pneg %p238
    $region35: #{tpu_custom_call.1} parent=1 // pred_check_branch
      %241 = sbr.rel (%p239) target = $region37
    $region36: #{tpu_custom_call.1} parent=1 // pred_region
      %vm242 = vcmask 1024
      %243 = vst.msk [vmem:[%s6] sm:$0x3] %vm242, 0.0
      %244 = vst.msk [vmem:[%s7] sm:$0x3] %vm242, 0.0
    $region37: #{tpu_custom_call.1} parent=1 // pred_fallthru
      _
    // Predicated region
    $region38: #{tpu_custom_call.1} parent=1 // pred_check
      _
    $region39: #{tpu_custom_call.1} parent=1 // pred_check_branch
      %246 = sbr.rel (0) target = $region41
    $region40: #{tpu_custom_call.1} parent=1 // pred_region
      _
    $region41: #{tpu_custom_call.1} parent=1 // pred_fallthru
      _
    // Predicated region
    $region42: #{tpu_custom_call.1} parent=1 // pred_check
      _
    $region43: #{tpu_custom_call.1} parent=1 // pred_check_branch
      %248 = sbr.rel (0) target = $region45
    $region44: #{tpu_custom_call.1} parent=1 // pred_region
      _
    $region45: #{tpu_custom_call.1} parent=1 // pred_fallthru
      _
    // Predicated region
    $region46: #{tpu_custom_call.1} parent=1 // pred_check
      _
    $region47: #{tpu_custom_call.1} parent=1 // pred_check_branch
      %250 = sbr.rel (0) target = $region49
    $region48: #{tpu_custom_call.1} parent=1 // pred_region
      _
    $region49: #{tpu_custom_call.1} parent=1 // pred_fallthru
      _
    // Predicated region
    $region50: #{tpu_custom_call.1} parent=1 // pred_check
      _
    $region51: #{tpu_custom_call.1} parent=1 // pred_check_branch
      %252 = sbr.rel (0) target = $region53
    $region52: #{tpu_custom_call.1} parent=1 // pred_region
      _
    $region53: #{tpu_custom_call.1} parent=1 // pred_fallthru
      _
    %253 = vsyncpa [#allocation5], 1
    %254 = vsyncpa [#allocation7], 1

</llo_original>
